<compile_context>
chip_gen: v7x
topology: tpu7x:2x2x1
jax: 0.10.0
libtpu: 0.0.40
codegen_flags: <defaults>
</compile_context>

<pallas_src>
import functools

import jax
import jax.numpy as jnp
from jax.experimental import pallas as pl
from jax.experimental.pallas import tpu as pltpu


# ------------------------- pass 1: pooled -> gates ---------------------------

def _pool_gate_kernel(rgb_ref, dep_ref, w1_ref, b1_ref, w2_ref, b2_ref,
                      grgb_ref, gdep_ref, rsum_rgb, rsum_dep, *, hw):
    """Accumulate spatial row-sums; on the last step run both excite stacks."""
    step = pl.program_id(0)

    @pl.when(step == 0)
    def _init():
        rsum_rgb[...] = jnp.zeros_like(rsum_rgb)
        rsum_dep[...] = jnp.zeros_like(rsum_dep)

    # One spatial (lane) reduction per stream per tile; reused below for both
    # the average pool and the skip-sum (review item: don't reduce twice).
    rsum_rgb[...] += jnp.sum(rgb_ref[...].astype(jnp.float32), axis=-1)  # (B, C)
    rsum_dep[...] += jnp.sum(dep_ref[...].astype(jnp.float32), axis=-1)  # (B, C)

    @pl.when(step == pl.num_programs(0) - 1)
    def _finalize():
        c = grgb_ref.shape[-1]
        rs_rgb = rsum_rgb[...]                                   # (B, C)
        rs_dep = rsum_dep[...]                                   # (B, C)
        inv_hw = 1.0 / float(hw)

        # Fused excite stacks: block-diagonal weights -> one matmul per FC
        # level covers both streams (M=B, K=2C, N=2Cr: pure MXU pipeline fill,
        # so halving the number of push/pop sequences is free latency).
        pooled = jnp.concatenate([rs_rgb, rs_dep], axis=-1) * inv_hw    # (B, 2C)
        z = jnp.dot(pooled, w1_ref[...],
                    preferred_element_type=jnp.float32) + b1_ref[...]   # (B, 2Cr)
        z = jnp.maximum(z, 0.0)                                         # ReLU
        z = jnp.dot(z, w2_ref[...],
                    preferred_element_type=jnp.float32) + b2_ref[...]   # (B, 2C)
        g = jax.nn.sigmoid(z)                                           # EUP exp

        # PyTorch: `if x.sum().item() < 1e-6: pass` -> identity gate.
        # TODO(synk): the host-side `.item()` branch is data-dependent; it is
        # implemented as a traced select on the (re-associated) global sum.
        total_rgb = jnp.sum(rs_rgb, keepdims=True)                       # (1, 1)
        total_dep = jnp.sum(rs_dep, keepdims=True)                       # (1, 1)
        grgb_ref[...] = jnp.where(total_rgb < 1e-6, 1.0, g[:, :c])
        gdep_ref[...] = jnp.where(total_dep < 1e-6, 1.0, g[:, c:])


# --------------------------- pass 2: gate apply -------------------------------

def _apply_kernel(rgb_ref, dep_ref, grgb_ref, gdep_ref, out_ref):
    """Streaming out = rgb * g_rgb + depth * g_depth on lane-dense tiles."""
    rgb = rgb_ref[...].astype(jnp.float32)
    dep = dep_ref[...].astype(jnp.float32)
    out = rgb * grgb_ref[...][:, :, None] + dep * gdep_ref[...][:, :, None]
    out_ref[...] = out.astype(out_ref.dtype)


# ------------------------------ module forward --------------------------------

def _pick_tile_hw(hw, max_tile):
    """Largest multiple of 128 dividing hw (<= max_tile); fall back to hw."""
    best = None
    t = 128
    while t <= min(hw, max_tile):
        if hw % t == 0:
            best = t
        t += 128
    return best if best is not None else hw


def _block_diag(a, b):
    za = jnp.zeros((a.shape[0], b.shape[1]), a.dtype)
    zb = jnp.zeros((b.shape[0], a.shape[1]), b.dtype)
    return jnp.concatenate(
        [jnp.concatenate([a, za], axis=1),
         jnp.concatenate([zb, b], axis=1)], axis=0)


def excite_fusion_add(rgb, depth, params, *, max_tile_hw=2048):
    """rgb, depth: (B, C, H, W); params: {'rgb': {...}, 'depth': {...}}."""
    B, C, H, W = rgb.shape
    HW = H * W
    rgb3 = rgb.reshape(B, C, HW)
    dep3 = depth.reshape(B, C, HW)

    tile_hw = _pick_tile_hw(HW, max_tile_hw)
    n_tiles = HW // tile_hw

    # Fused block-diagonal FC weights (pre-transposed so the kernel issues no
    # XLU transposes).  In a real model these would be precomputed once.
    p_rgb, p_dep = params["rgb"], params["depth"]
    cr = p_rgb["w1"].shape[0]
    w1_bd = _block_diag(p_rgb["w1"].T, p_dep["w1"].T)                    # (2C, 2Cr)
    w2_bd = _block_diag(p_rgb["w2"].T, p_dep["w2"].T)                    # (2Cr, 2C)
    b1_cat = jnp.concatenate([p_rgb["b1"], p_dep["b1"]]).reshape(1, 2 * cr)
    b2_cat = jnp.concatenate([p_rgb["b2"], p_dep["b2"]]).reshape(1, 2 * C)

    cparams_reduce = pltpu.CompilerParams(
        dimension_semantics=("arbitrary",),          # spatial reduction axis
        vmem_limit_bytes=32 * 1024 * 1024)           # > v5e's 16 MiB default
    cparams_apply = pltpu.CompilerParams(
        dimension_semantics=("parallel",),           # v7x megacore sharding
        vmem_limit_bytes=32 * 1024 * 1024)

    stream_spec = pl.BlockSpec((B, C, tile_hw), lambda s: (0, 0, s),
                               memory_space=pltpu.VMEM)
    const2d = lambda shape: pl.BlockSpec(shape, lambda s: (0, 0),
                                         memory_space=pltpu.VMEM)

    # ---- pass 1: pooled row-sums + both excite stacks -> (B, C) gates ----
    g_rgb, g_dep = pl.pallas_call(
        functools.partial(_pool_gate_kernel, hw=HW),
        grid=(n_tiles,),
        in_specs=[
            stream_spec,                 # rgb tiles
            stream_spec,                 # depth tiles
            const2d((2 * C, 2 * cr)),    # W1 block-diag (VMEM-resident)
            const2d((1, 2 * cr)),        # b1
            const2d((2 * cr, 2 * C)),    # W2 block-diag
            const2d((1, 2 * C)),         # b2
        ],
        out_specs=(const2d((B, C)), const2d((B, C))),
        out_shape=(jax.ShapeDtypeStruct((B, C), jnp.float32),
                   jax.ShapeDtypeStruct((B, C), jnp.float32)),
        scratch_shapes=[pltpu.VMEM((B, C), jnp.float32),
                        pltpu.VMEM((B, C), jnp.float32)],
        compiler_params=cparams_reduce,
    )(rgb3, dep3, w1_bd, b1_cat, w2_bd, b2_cat)

    # ---- pass 2: streaming gate-apply + add over lane-dense spatial tiles ----
    out = pl.pallas_call(
        _apply_kernel,
        grid=(n_tiles,),
        in_specs=[
            stream_spec,                 # rgb tiles
            stream_spec,                 # depth tiles
            const2d((B, C)),             # g_rgb (resident, no re-DMA)
            const2d((B, C)),             # g_depth
        ],
        out_specs=stream_spec,
        out_shape=jax.ShapeDtypeStruct((B, C, HW), rgb.dtype),
        compiler_params=cparams_apply,
    )(rgb3, dep3, g_rgb, g_dep)

    return out.reshape(B, C, H, W)


# ---------------------------- pure-JAX reference ------------------------------

def _reference(rgb, depth, params):
    def se(x, p):
        pooled = jnp.mean(x, axis=(2, 3))                      # (B, C)
        z = jax.nn.relu(pooled @ p["w1"].T + p["b1"])
        g = jax.nn.sigmoid(z @ p["w2"].T + p["b2"])
        return x * g[:, :, None, None]

    rgb_o = jnp.where(jnp.sum(rgb) < 1e-6, rgb, se(rgb, params["rgb"]))
    dep_o = jnp.where(jnp.sum(depth) < 1e-6, depth, se(depth, params["depth"]))
    return rgb_o + dep_o


# ----------------------------------- main --------------------------------------

def _init_params(key, channels, reduction):
    cr = max(channels // reduction, 1)
    ks = jax.random.split(key, 8)

    def se_params(k1, k2, k3, k4):
        return {
            "w1": 0.2 * jax.random.normal(k1, (cr, channels), jnp.float32),
            "b1": 0.1 * jax.random.normal(k2, (cr,), jnp.float32),
            "w2": 0.2 * jax.random.normal(k3, (channels, cr), jnp.float32),
            "b2": 0.1 * jax.random.normal(k4, (channels,), jnp.float32),
        }

    return {"rgb": se_params(*ks[:4]), "depth": se_params(*ks[4:])}


if __name__ == "__main__":
    B, C, H, W = 2, 32, 16, 16
    reduction = 4

    key = jax.random.PRNGKey(0)
    k_rgb, k_dep, k_par = jax.random.split(key, 3)
    # Small positive offset so both streams take the "apply SE" branch.
    rgb = jax.random.normal(k_rgb, (B, C, H, W), jnp.float32) + 0.1
    depth = jax.random.normal(k_dep, (B, C, H, W), jnp.float32) + 0.1
    params = _init_params(k_par, C, reduction)

    ref = _reference(rgb, depth, params)

    # Force a multi-tile spatial grid at this toy shape so the accumulator and
    # pipelined apply paths are exercised (production sizes use 512-2048 tiles).
    out = jax.block_until_ready(
        excite_fusion_add(rgb, depth, params, max_tile_hw=128))
    assert out.shape == (B, C, H, W)
    assert jnp.allclose(out, ref, atol=1e-4, rtol=1e-4), (
        float(jnp.max(jnp.abs(out - ref))))

    # Single-tile path (whole spatial extent in one lane-dense block).
    out1 = jax.block_until_ready(excite_fusion_add(rgb, depth, params))
    assert jnp.allclose(out1, ref, atol=1e-4, rtol=1e-4), (
        float(jnp.max(jnp.abs(out1 - ref))))

    # Skip branch: all-zero depth -> sum < 1e-6 -> identity gate on depth.
    depth0 = jnp.zeros_like(depth)
    out0 = jax.block_until_ready(
        excite_fusion_add(rgb, depth0, params, max_tile_hw=128))
    ref0 = _reference(rgb, depth0, params)
    assert jnp.allclose(out0, ref0, atol=1e-4, rtol=1e-4), (
        float(jnp.max(jnp.abs(out0 - ref0))))

    print("KERNEL_OK")
</pallas_src>

<mosaic_0001>
module attributes {stable_mosaic.version = 11 : i64} {
  func.func @_pool_gate_kernel(%arg0: i32, %arg1: memref<2x32x128xf32, #tpu.memory_space<vmem>>, %arg2: memref<2x32x128xf32, #tpu.memory_space<vmem>>, %arg3: memref<64x16xf32, #tpu.memory_space<vmem>>, %arg4: memref<1x16xf32, #tpu.memory_space<vmem>>, %arg5: memref<16x64xf32, #tpu.memory_space<vmem>>, %arg6: memref<1x64xf32, #tpu.memory_space<vmem>>, %arg7: memref<2x32xf32, #tpu.memory_space<vmem>>, %arg8: memref<2x32xf32, #tpu.memory_space<vmem>>, %arg9: memref<2x32xf32, #tpu.memory_space<vmem>>, %arg10: memref<2x32xf32, #tpu.memory_space<vmem>>) attributes {dimension_semantics = [#tpu.dimension_semantics<arbitrary>], iteration_bounds = array<i64: 2>, scalar_prefetch = 0 : i64, scratch_operands = 2 : i64, tpu.core_type = #tpu.core_type<tc>, window_params = [{transform_indices = @transform_0, window_bounds = array<i64: 2, 32, 128>}, {transform_indices = @transform_1, window_bounds = array<i64: 2, 32, 128>}, {pipeline_mode = #tpu.pipeline_mode<synchronous>, transform_indices = @transform_2, window_bounds = array<i64: 64, 16>}, {pipeline_mode = #tpu.pipeline_mode<synchronous>, transform_indices = @transform_3, window_bounds = array<i64: 1, 16>}, {pipeline_mode = #tpu.pipeline_mode<synchronous>, transform_indices = @transform_4, window_bounds = array<i64: 16, 64>}, {pipeline_mode = #tpu.pipeline_mode<synchronous>, transform_indices = @transform_5, window_bounds = array<i64: 1, 64>}, {pipeline_mode = #tpu.pipeline_mode<synchronous>, transform_indices = @transform_6, window_bounds = array<i64: 2, 32>}, {pipeline_mode = #tpu.pipeline_mode<synchronous>, transform_indices = @transform_7, window_bounds = array<i64: 2, 32>}]} {
    %c0_i32 = arith.constant 0 : i32
    %0 = arith.cmpi eq, %arg0, %c0_i32 : i32
    %1 = arith.extui %0 : i1 to i32
    %c0_i32_0 = arith.constant 0 : i32
    %2 = arith.cmpi ne, %1, %c0_i32_0 : i32
    scf.if %2 {
      %cst_16 = arith.constant 0.000000e+00 : f32
      %16 = vector.broadcast %cst_16 : f32 to vector<2x32xf32>
      %c0_17 = arith.constant 0 : index
      %c0_18 = arith.constant 0 : index
      %17 = vector.load %arg9[%c0_17, %c0_18] : memref<2x32xf32, #tpu.memory_space<vmem>>, vector<2x32xf32>
      tpu.vector_store %arg9[%c0_17, %c0_18], %16 {strides = array<i32>} : memref<2x32xf32, #tpu.memory_space<vmem>>, vector<2x32xf32>,
      %cst_19 = arith.constant 0.000000e+00 : f32
      %18 = vector.broadcast %cst_19 : f32 to vector<2x32xf32>
      %c0_20 = arith.constant 0 : index
      %c0_21 = arith.constant 0 : index
      %19 = vector.load %arg10[%c0_20, %c0_21] : memref<2x32xf32, #tpu.memory_space<vmem>>, vector<2x32xf32>
      tpu.vector_store %arg10[%c0_20, %c0_21], %18 {strides = array<i32>} : memref<2x32xf32, #tpu.memory_space<vmem>>, vector<2x32xf32>,
    } else {
    }
    %c0 = arith.constant 0 : index
    %c0_1 = arith.constant 0 : index
    %3 = vector.load %arg9[%c0, %c0_1] : memref<2x32xf32, #tpu.memory_space<vmem>>, vector<2x32xf32>
    %c0_2 = arith.constant 0 : index
    %c0_3 = arith.constant 0 : index
    %c0_4 = arith.constant 0 : index
    %4 = vector.load %arg1[%c0_2, %c0_3, %c0_4] : memref<2x32x128xf32, #tpu.memory_space<vmem>>, vector<2x32x128xf32>
    %cst = arith.constant dense<0.000000e+00> : vector<2x32xf32>
    %5 = vector.multi_reduction <add>, %4, %cst [2] : vector<2x32x128xf32> to vector<2x32xf32>
    %6 = arith.addf %3, %5 : vector<2x32xf32>
    %c0_5 = arith.constant 0 : index
    %c0_6 = arith.constant 0 : index
    %7 = vector.load %arg9[%c0_5, %c0_6] : memref<2x32xf32, #tpu.memory_space<vmem>>, vector<2x32xf32>
    tpu.vector_store %arg9[%c0_5, %c0_6], %6 {strides = array<i32>} : memref<2x32xf32, #tpu.memory_space<vmem>>, vector<2x32xf32>,
    %c0_7 = arith.constant 0 : index
    %c0_8 = arith.constant 0 : index
    %8 = vector.load %arg10[%c0_7, %c0_8] : memref<2x32xf32, #tpu.memory_space<vmem>>, vector<2x32xf32>
    %c0_9 = arith.constant 0 : index
    %c0_10 = arith.constant 0 : index
    %c0_11 = arith.constant 0 : index
    %9 = vector.load %arg2[%c0_9, %c0_10, %c0_11] : memref<2x32x128xf32, #tpu.memory_space<vmem>>, vector<2x32x128xf32>
    %cst_12 = arith.constant dense<0.000000e+00> : vector<2x32xf32>
    %10 = vector.multi_reduction <add>, %9, %cst_12 [2] : vector<2x32x128xf32> to vector<2x32xf32>
    %11 = arith.addf %8, %10 : vector<2x32xf32>
    %c0_13 = arith.constant 0 : index
    %c0_14 = arith.constant 0 : index
    %12 = vector.load %arg10[%c0_13, %c0_14] : memref<2x32xf32, #tpu.memory_space<vmem>>, vector<2x32xf32>
    tpu.vector_store %arg10[%c0_13, %c0_14], %11 {strides = array<i32>} : memref<2x32xf32, #tpu.memory_space<vmem>>, vector<2x32xf32>,
    %c1_i32 = arith.constant 1 : i32
    %13 = arith.cmpi eq, %arg0, %c1_i32 : i32
    %14 = arith.extui %13 : i1 to i32
    %c0_i32_15 = arith.constant 0 : i32
    %15 = arith.cmpi ne, %14, %c0_i32_15 : i32
    scf.if %15 {
      %c0_16 = arith.constant 0 : index
      %c0_17 = arith.constant 0 : index
      %16 = vector.load %arg9[%c0_16, %c0_17] : memref<2x32xf32, #tpu.memory_space<vmem>>, vector<2x32xf32>
      %c0_18 = arith.constant 0 : index
      %c0_19 = arith.constant 0 : index
      %17 = vector.load %arg10[%c0_18, %c0_19] : memref<2x32xf32, #tpu.memory_space<vmem>>, vector<2x32xf32>
      %18 = tpu.concatenate %16, %17 in 1 : vector<2x32xf32>, vector<2x32xf32> -> vector<2x64xf32>
      %cst_20 = arith.constant 3.906250e-03 : f32
      %19 = vector.broadcast %cst_20 : f32 to vector<2x64xf32>
      %20 = arith.mulf %18, %19 : vector<2x64xf32>
      %c0_21 = arith.constant 0 : index
      %c0_22 = arith.constant 0 : index
      %21 = vector.load %arg3[%c0_21, %c0_22] : memref<64x16xf32, #tpu.memory_space<vmem>>, vector<64x16xf32>
      %cst_23 = arith.constant dense<0.000000e+00> : vector<2x16xf32>
      %22 = tpu.matmul %20, %21, %cst_23 {dimension_numbers = #tpu.dot_dimension_numbers<[1], [0], [0], [1], [0, 0, 1, 1], [], []>} : vector<2x64xf32>, vector<64x16xf32>, vector<2x16xf32> -> vector<2x16xf32>
      %c0_24 = arith.constant 0 : index
      %c0_25 = arith.constant 0 : index
      %23 = vector.load %arg4[%c0_24, %c0_25] : memref<1x16xf32, #tpu.memory_space<vmem>>, vector<1x16xf32>
      %24 = vector.broadcast %23 : vector<1x16xf32> to vector<2x16xf32>
      %25 = arith.addf %22, %24 : vector<2x16xf32>
      %cst_26 = arith.constant 0.000000e+00 : f32
      %26 = vector.broadcast %cst_26 : f32 to vector<2x16xf32>
      %27 = arith.maximumf %25, %26 : vector<2x16xf32>
      %c0_27 = arith.constant 0 : index
      %c0_28 = arith.constant 0 : index
      %28 = vector.load %arg5[%c0_27, %c0_28] : memref<16x64xf32, #tpu.memory_space<vmem>>, vector<16x64xf32>
      %cst_29 = arith.constant dense<0.000000e+00> : vector<2x64xf32>
      %29 = tpu.matmul %27, %28, %cst_29 {dimension_numbers = #tpu.dot_dimension_numbers<[1], [0], [0], [1], [0, 0, 1, 1], [], []>} : vector<2x16xf32>, vector<16x64xf32>, vector<2x64xf32> -> vector<2x64xf32>
      %c0_30 = arith.constant 0 : index
      %c0_31 = arith.constant 0 : index
      %30 = vector.load %arg6[%c0_30, %c0_31] : memref<1x64xf32, #tpu.memory_space<vmem>>, vector<1x64xf32>
      %31 = vector.broadcast %30 : vector<1x64xf32> to vector<2x64xf32>
      %32 = arith.addf %29, %31 : vector<2x64xf32>
      %33 = arith.negf %32 : vector<2x64xf32>
      %34 = math.exp %33 : vector<2x64xf32>
      %cst_32 = arith.constant 1.000000e+00 : f32
      %35 = vector.broadcast %cst_32 : f32 to vector<2x64xf32>
      %36 = arith.addf %35, %34 : vector<2x64xf32>
      %37 = arith.divf %35, %36 : vector<2x64xf32>
      %38 = vector.shape_cast %16 : vector<2x32xf32> to vector<1x2x32xf32>
      %cst_33 = arith.constant dense<0.000000e+00> : vector<1xf32>
      %39 = vector.multi_reduction <add>, %38, %cst_33 [1, 2] : vector<1x2x32xf32> to vector<1xf32>
      %40 = vector.shape_cast %39 : vector<1xf32> to vector<1x1x1xf32>
      %41 = vector.extract %40[0, 0, 0] : f32 from vector<1x1x1xf32>
      %42 = vector.broadcast %41 : f32 to vector<1x1xf32>
      %43 = vector.shape_cast %17 : vector<2x32xf32> to vector<1x2x32xf32>
      %cst_34 = arith.constant dense<0.000000e+00> : vector<1xf32>
      %44 = vector.multi_reduction <add>, %43, %cst_34 [1, 2] : vector<1x2x32xf32> to vector<1xf32>
      %45 = vector.shape_cast %44 : vector<1xf32> to vector<1x1x1xf32>
      %46 = vector.extract %45[0, 0, 0] : f32 from vector<1x1x1xf32>
      %47 = vector.broadcast %46 : f32 to vector<1x1xf32>
      %cst_35 = arith.constant 9.99999997E-7 : f32
      %48 = vector.broadcast %cst_35 : f32 to vector<1x1xf32>
      %49 = arith.cmpf olt, %42, %48 : vector<1x1xf32>
      %50 = vector.extract_strided_slice %37 {offsets = [0, 0], sizes = [2, 32], strides = [1, 1]} : vector<2x64xf32> to vector<2x32xf32>
      %cst_36 = arith.constant 1.000000e+00 : f32
      %51 = vector.shape_cast %49 : vector<1x1xi1> to vector<1x1xi1>
      %52 = vector.broadcast %51 : vector<1x1xi1> to vector<2x32xi1>
      %53 = vector.broadcast %cst_36 : f32 to vector<2x32xf32>
      %54 = arith.select %52, %53, %50 : vector<2x32xi1>, vector<2x32xf32>
      %c0_37 = arith.constant 0 : index
      %c0_38 = arith.constant 0 : index
      %55 = vector.load %arg7[%c0_37, %c0_38] : memref<2x32xf32, #tpu.memory_space<vmem>>, vector<2x32xf32>
      tpu.vector_store %arg7[%c0_37, %c0_38], %54 {strides = array<i32>} : memref<2x32xf32, #tpu.memory_space<vmem>>, vector<2x32xf32>,
      %cst_39 = arith.constant 9.99999997E-7 : f32
      %56 = vector.broadcast %cst_39 : f32 to vector<1x1xf32>
      %57 = arith.cmpf olt, %47, %56 : vector<1x1xf32>
      %58 = vector.extract_strided_slice %37 {offsets = [0, 32], sizes = [2, 32], strides = [1, 1]} : vector<2x64xf32> to vector<2x32xf32>
      %cst_40 = arith.constant 1.000000e+00 : f32
      %59 = vector.shape_cast %57 : vector<1x1xi1> to vector<1x1xi1>
      %60 = vector.broadcast %59 : vector<1x1xi1> to vector<2x32xi1>
      %61 = vector.broadcast %cst_40 : f32 to vector<2x32xf32>
      %62 = arith.select %60, %61, %58 : vector<2x32xi1>, vector<2x32xf32>
      %c0_41 = arith.constant 0 : index
      %c0_42 = arith.constant 0 : index
      %63 = vector.load %arg8[%c0_41, %c0_42] : memref<2x32xf32, #tpu.memory_space<vmem>>, vector<2x32xf32>
      tpu.vector_store %arg8[%c0_41, %c0_42], %62 {strides = array<i32>} : memref<2x32xf32, #tpu.memory_space<vmem>>, vector<2x32xf32>,
    } else {
    }
    return
  }
  func.func @transform_0(%arg0: i32) -> (i32, i32, i32) {
    %c0_i32 = arith.constant 0 : i32
    %c0_i32_0 = arith.constant 0 : i32
    %c0_i32_1 = arith.constant 0 : i32
    return %c0_i32, %c0_i32_0, %arg0 : i32, i32, i32
  }
  func.func @transform_1(%arg0: i32) -> (i32, i32, i32) {
    %c0_i32 = arith.constant 0 : i32
    %c0_i32_0 = arith.constant 0 : i32
    %c0_i32_1 = arith.constant 0 : i32
    return %c0_i32, %c0_i32_0, %arg0 : i32, i32, i32
  }
  func.func @transform_2(%arg0: i32) -> (i32, i32) {
    %c0_i32 = arith.constant 0 : i32
    %c0_i32_0 = arith.constant 0 : i32
    %c0_i32_1 = arith.constant 0 : i32
    return %c0_i32, %c0_i32_0 : i32, i32
  }
  func.func @transform_3(%arg0: i32) -> (i32, i32) {
    %c0_i32 = arith.constant 0 : i32
    %c0_i32_0 = arith.constant 0 : i32
    %c0_i32_1 = arith.constant 0 : i32
    return %c0_i32, %c0_i32_0 : i32, i32
  }
  func.func @transform_4(%arg0: i32) -> (i32, i32) {
    %c0_i32 = arith.constant 0 : i32
    %c0_i32_0 = arith.constant 0 : i32
    %c0_i32_1 = arith.constant 0 : i32
    return %c0_i32, %c0_i32_0 : i32, i32
  }
  func.func @transform_5(%arg0: i32) -> (i32, i32) {
    %c0_i32 = arith.constant 0 : i32
    %c0_i32_0 = arith.constant 0 : i32
    %c0_i32_1 = arith.constant 0 : i32
    return %c0_i32, %c0_i32_0 : i32, i32
  }
  func.func @transform_6(%arg0: i32) -> (i32, i32) {
    %c0_i32 = arith.constant 0 : i32
    %c0_i32_0 = arith.constant 0 : i32
    %c0_i32_1 = arith.constant 0 : i32
    return %c0_i32, %c0_i32_0 : i32, i32
  }
  func.func @transform_7(%arg0: i32) -> (i32, i32) {
    %c0_i32 = arith.constant 0 : i32
    %c0_i32_0 = arith.constant 0 : i32
    %c0_i32_1 = arith.constant 0 : i32
    return %c0_i32, %c0_i32_0 : i32, i32
  }
}

</mosaic_0001>

<llo_original>
// kernel: tpu_custom_call.1
$region0: #{tpu_custom_call.1}
  #allocation0 [shape = 'u32[]', space=smem, size = 0x4, offset = 0x4, fixed_abs, tag = 'smem constant byte address 0x4 - core index']
  #allocation1 [shape = 'u32[144,128]{1,0:T(1,128)}', space=vmem, size = 0x12000, scoped, tag = 'internal scratch']
  #allocation2 [shape = 'f32[2,32]{1,0:T(2,128)}', space=vmem, size = 0x400, scoped, tag = 'scratch operand']
  #allocation3 [shape = 'f32[2,32]{1,0:T(2,128)}', space=vmem, size = 0x400, scoped, tag = 'scratch operand']
  %s0 = inlined_call_operand.hbm [shape: f32[2,32,256], index: 0, kind: input, shape index: {}]
  %s1 = inlined_call_operand.hbm [shape: f32[2,32,256], index: 1, kind: input, shape index: {}]
  %s2 = inlined_call_operand.vmem [shape: f32[64,16], index: 2, kind: input, shape index: {}]
  %s3 = inlined_call_operand.vmem [shape: f32[1,16], index: 3, kind: input, shape index: {}]
  %s4 = inlined_call_operand.vmem [shape: f32[16,64], index: 4, kind: input, shape index: {}]
  %s5 = inlined_call_operand.vmem [shape: f32[1,64], index: 5, kind: input, shape index: {}]
  %s6 = inlined_call_operand.hbm [shape: f32[2,32], index: 6, kind: output, shape index: {0}]
  %s7 = inlined_call_operand.hbm [shape: f32[2,32], index: 7, kind: output, shape index: {1}]
  %8 = xla_tuple %s6, %s7
  %s9 = sld [smem:[#allocation0]]
  $region81: #{tpu_custom_call.1} parent=0
    _
  %s11 = ssub.s32 1, %s9
  %s12 = scalar_select 0, %s11, %s9
  $region1: #{tpu_custom_call.1} parent=0
    #allocation4 [shape = 'u8[65536]{0}', space=vmem, size = 0x10000, scoped, tag = 'input window, operand 0']
    #allocation5 [shape = 's32[2]{0}', space=sflag, size = 0x8, scoped, tag = 'scoped memory for tpu_custom_call.1']
    #allocation6 [shape = 's32[2]{0}', space=sflag, size = 0x8, scoped, tag = 'scoped memory for tpu_custom_call.1']
    #allocation7 [shape = 'u8[65536]{0}', space=vmem, size = 0x10000, scoped, tag = 'input window, operand 1']
    #allocation8 [shape = 's32[2]{0}', space=sflag, size = 0x8, scoped, tag = 'scoped memory for tpu_custom_call.1']
    #allocation9 [shape = 'u8[1024]{0}', space=vmem, size = 0x400, scoped, tag = 'output window, operand 0, single buffered']
    #allocation10 [shape = 'u8[1024]{0}', space=vmem, size = 0x400, scoped, tag = 'output window, operand 1, single buffered']
    #allocation11 [shape = 's32[1]{0}', space=sflag, size = 0x4, scoped, tag = 'scoped memory for tpu_custom_call.1']
    %13 = vsyncpa [#allocation5], 0
    %s14 = scalar_lea.sflag [#allocation5], 1
    %15 = vsyncpa %s14, 0
    %16 = vsyncpa [#allocation8], 0
    %s17 = scalar_lea.sflag [#allocation8], 1
    %18 = vsyncpa %s17, 0
    %19 = vsyncpa [#allocation6], 0
    %20 = vsyncpa [#allocation11], 0
    loop: start=0, step=1, limit=4
    $region2: #{tpu_custom_call.1} parent=1 // loop_pre_header
      _
    $region3: #{tpu_custom_call.1} parent=1 // loop_header
      %s22 = sphi 0, %s26
      %p23 = scmp.ge.s32.totalorder %s22, 4
      %s32 = sphi 0, %s34
      %s35 = sphi 0, %s32
      %s36 = sphi 0, %s35
      %s52 = sphi 0, %s36
      %s58 = sphi 0, %s60
      %s61 = sphi 0, %s58
      %s62 = sphi 0, %s61
      %s78 = sphi 0, %s62
      %s82 = sphi 0, %s82
      %s84 = sphi 0, %s82
      %s85 = sphi 0, %s84
      %s99 = sphi 0, %s85
      %s103 = sphi 0, %s103
      %s105 = sphi 0, %s103
      %s106 = sphi 0, %s105
      %s120 = sphi 0, %s106
      %s124 = sphi 0, %s124
      %s126 = sphi 0, %s124
      %s127 = sphi 0, %s126
      %s141 = sphi 0, %s127
      %s145 = sphi 0, %s145
      %s147 = sphi 0, %s145
      %s148 = sphi 0, %s147
      %s162 = sphi 0, %s148
      %s166 = sphi 0, %s166
      %s168 = sphi 0, %s166
      %s169 = sphi 0, %s168
      %s183 = sphi 0, %s169
      %s187 = sphi 0, %s187
      %s189 = sphi 0, %s187
      %s190 = sphi 0, %s189
      %s204 = sphi 0, %s190
    $region4: #{tpu_custom_call.1} parent=1 // loop_header_branch
      %25 = sbr.rel (%p23) target = $region8
    $region5: #{tpu_custom_call.1} parent=1 // loop_body
      %s27 = ssub.s32 %s22, 1
      %s28 = ssub.s32 %s22, 2
      %s29 = sadd.s32 %s22, 1
      %s30 = ssub.s32 %s22, %s29
      %p31 = scmp.eq.s32.totalorder %s30, 0
      %s33 = sadd.s32 %s32, 1
      %s34 = scalar_select %p31, %s32, %s33
      %p37 = pneg %p31
      %p38 = scmp.eq.s32.totalorder %s22, 1
      %p39 = por %p37, %p38
      %p40 = scmp.ne.s32.totalorder %s32, %s35
      %p41 = scmp.eq.s32.totalorder %s22, 0
      %p42 = por %p40, %p41
      %p43 = scmp.ne.s32.totalorder %s32, %s35
      %p44 = scmp.eq.s32.totalorder %s27, 1
      %p45 = por %p43, %p44
      %p46 = scmp.ne.s32.totalorder %s35, %s36
      %p47 = scmp.eq.s32.totalorder %s27, 0
      %p48 = por %p46, %p47
      %p49 = scmp.ne.s32.totalorder %s35, %s36
      %p50 = scmp.eq.s32.totalorder %s28, 1
      %p51 = por %p49, %p50
      %p53 = scmp.ne.s32.totalorder %s36, %s52
      %p54 = scmp.eq.s32.totalorder %s28, 0
      %p55 = por %p53, %p54
      %s56 = ssub.s32 %s22, %s29
      %p57 = scmp.eq.s32.totalorder %s56, 0
      %s59 = sadd.s32 %s58, 1
      %s60 = scalar_select %p57, %s58, %s59
      %p63 = pneg %p57
      %p64 = scmp.eq.s32.totalorder %s22, 1
      %p65 = por %p63, %p64
      %p66 = scmp.ne.s32.totalorder %s58, %s61
      %p67 = scmp.eq.s32.totalorder %s22, 0
      %p68 = por %p66, %p67
      %p69 = scmp.ne.s32.totalorder %s58, %s61
      %p70 = scmp.eq.s32.totalorder %s27, 1
      %p71 = por %p69, %p70
      %p72 = scmp.ne.s32.totalorder %s61, %s62
      %p73 = scmp.eq.s32.totalorder %s27, 0
      %p74 = por %p72, %p73
      %p75 = scmp.ne.s32.totalorder %s61, %s62
      %p76 = scmp.eq.s32.totalorder %s28, 1
      %p77 = por %p75, %p76
      %p79 = scmp.ne.s32.totalorder %s62, %s78
      %p80 = scmp.eq.s32.totalorder %s28, 0
      %p81 = por %p79, %p80
      %s83 = sadd.s32 %s82, 1
      %p86 = scmp.eq.s32.totalorder %s22, 1
      %p87 = scmp.ne.s32.totalorder %s82, %s84
      %p88 = scmp.eq.s32.totalorder %s22, 0
      %p89 = por %p87, %p88
      %p90 = scmp.ne.s32.totalorder %s82, %s84
      %p91 = scmp.eq.s32.totalorder %s27, 1
      %p92 = por %p90, %p91
      %p93 = scmp.ne.s32.totalorder %s84, %s85
      %p94 = scmp.eq.s32.totalorder %s27, 0
      %p95 = por %p93, %p94
      %p96 = scmp.ne.s32.totalorder %s84, %s85
      %p97 = scmp.eq.s32.totalorder %s28, 1
      %p98 = por %p96, %p97
      %p100 = scmp.ne.s32.totalorder %s85, %s99
      %p101 = scmp.eq.s32.totalorder %s28, 0
      %p102 = por %p100, %p101
      %s104 = sadd.s32 %s103, 1
      %p107 = scmp.eq.s32.totalorder %s22, 1
      %p108 = scmp.ne.s32.totalorder %s103, %s105
      %p109 = scmp.eq.s32.totalorder %s22, 0
      %p110 = por %p108, %p109
      %p111 = scmp.ne.s32.totalorder %s103, %s105
      %p112 = scmp.eq.s32.totalorder %s27, 1
      %p113 = por %p111, %p112
      %p114 = scmp.ne.s32.totalorder %s105, %s106
      %p115 = scmp.eq.s32.totalorder %s27, 0
      %p116 = por %p114, %p115
      %p117 = scmp.ne.s32.totalorder %s105, %s106
      %p118 = scmp.eq.s32.totalorder %s28, 1
      %p119 = por %p117, %p118
      %p121 = scmp.ne.s32.totalorder %s106, %s120
      %p122 = scmp.eq.s32.totalorder %s28, 0
      %p123 = por %p121, %p122
      %s125 = sadd.s32 %s124, 1
      %p128 = scmp.eq.s32.totalorder %s22, 1
      %p129 = scmp.ne.s32.totalorder %s124, %s126
      %p130 = scmp.eq.s32.totalorder %s22, 0
      %p131 = por %p129, %p130
      %p132 = scmp.ne.s32.totalorder %s124, %s126
      %p133 = scmp.eq.s32.totalorder %s27, 1
      %p134 = por %p132, %p133
      %p135 = scmp.ne.s32.totalorder %s126, %s127
      %p136 = scmp.eq.s32.totalorder %s27, 0
      %p137 = por %p135, %p136
      %p138 = scmp.ne.s32.totalorder %s126, %s127
      %p139 = scmp.eq.s32.totalorder %s28, 1
      %p140 = por %p138, %p139
      %p142 = scmp.ne.s32.totalorder %s127, %s141
      %p143 = scmp.eq.s32.totalorder %s28, 0
      %p144 = por %p142, %p143
      %s146 = sadd.s32 %s145, 1
      %p149 = scmp.eq.s32.totalorder %s22, 1
      %p150 = scmp.ne.s32.totalorder %s145, %s147
      %p151 = scmp.eq.s32.totalorder %s22, 0
      %p152 = por %p150, %p151
      %p153 = scmp.ne.s32.totalorder %s145, %s147
      %p154 = scmp.eq.s32.totalorder %s27, 1
      %p155 = por %p153, %p154
      %p156 = scmp.ne.s32.totalorder %s147, %s148
      %p157 = scmp.eq.s32.totalorder %s27, 0
      %p158 = por %p156, %p157
      %p159 = scmp.ne.s32.totalorder %s147, %s148
      %p160 = scmp.eq.s32.totalorder %s28, 1
      %p161 = por %p159, %p160
      %p163 = scmp.ne.s32.totalorder %s148, %s162
      %p164 = scmp.eq.s32.totalorder %s28, 0
      %p165 = por %p163, %p164
      %s167 = sadd.s32 %s166, 1
      %p170 = scmp.eq.s32.totalorder %s22, 1
      %p171 = scmp.ne.s32.totalorder %s166, %s168
      %p172 = scmp.eq.s32.totalorder %s22, 0
      %p173 = por %p171, %p172
      %p174 = scmp.ne.s32.totalorder %s166, %s168
      %p175 = scmp.eq.s32.totalorder %s27, 1
      %p176 = por %p174, %p175
      %p177 = scmp.ne.s32.totalorder %s168, %s169
      %p178 = scmp.eq.s32.totalorder %s27, 0
      %p179 = por %p177, %p178
      %p180 = scmp.ne.s32.totalorder %s168, %s169
      %p181 = scmp.eq.s32.totalorder %s28, 1
      %p182 = por %p180, %p181
      %p184 = scmp.ne.s32.totalorder %s169, %s183
      %p185 = scmp.eq.s32.totalorder %s28, 0
      %p186 = por %p184, %p185
      %s188 = sadd.s32 %s187, 1
      %p191 = scmp.eq.s32.totalorder %s22, 1
      %p192 = scmp.ne.s32.totalorder %s187, %s189
      %p193 = scmp.eq.s32.totalorder %s22, 0
      %p194 = por %p192, %p193
      %p195 = scmp.ne.s32.totalorder %s187, %s189
      %p196 = scmp.eq.s32.totalorder %s27, 1
      %p197 = por %p195, %p196
      %p198 = scmp.ne.s32.totalorder %s189, %s190
      %p199 = scmp.eq.s32.totalorder %s27, 0
      %p200 = por %p198, %p199
      %p201 = scmp.ne.s32.totalorder %s189, %s190
      %p202 = scmp.eq.s32.totalorder %s28, 1
      %p203 = por %p201, %p202
      %p205 = scmp.ne.s32.totalorder %s190, %s204
      %p206 = scmp.eq.s32.totalorder %s28, 0
      %p207 = por %p205, %p206
      %p208 = scmp.le.s32.totalorder 1, %s22
      %p209 = scmp.lt.s32.totalorder %s22, 3
      %p210 = pnand %p208, %p209
      %p211 = pneg %p210
      // Predicated region
      $region9: #{tpu_custom_call.1} parent=5 // pred_check
        _
      $region10: #{tpu_custom_call.1} parent=5 // pred_check_branch
        %213 = sbr.rel (%p210) target = $region12
      $region11: #{tpu_custom_call.1} parent=5 // pred_region
        %s214 = ssub.s32 %s22, 1
        // Predicated region
        $region13: #{tpu_custom_call.1} parent=11 // pred_check
          %p215 = pneg %p95
        $region14: #{tpu_custom_call.1} parent=11 // pred_check_branch
          %217 = sbr.rel (%p215) target = $region16
        $region15: #{tpu_custom_call.1} parent=11 // pred_region
          _
        $region16: #{tpu_custom_call.1} parent=11 // pred_fallthru
          _
        // Predicated region
        $region17: #{tpu_custom_call.1} parent=11 // pred_check
          %p218 = pneg %p116
        $region18: #{tpu_custom_call.1} parent=11 // pred_check_branch
          %220 = sbr.rel (%p218) target = $region20
        $region19: #{tpu_custom_call.1} parent=11 // pred_region
          _
        $region20: #{tpu_custom_call.1} parent=11 // pred_fallthru
          _
        // Predicated region
        $region21: #{tpu_custom_call.1} parent=11 // pred_check
          %p221 = pneg %p137
        $region22: #{tpu_custom_call.1} parent=11 // pred_check_branch
          %223 = sbr.rel (%p221) target = $region24
        $region23: #{tpu_custom_call.1} parent=11 // pred_region
          _
        $region24: #{tpu_custom_call.1} parent=11 // pred_fallthru
          _
        // Predicated region
        $region25: #{tpu_custom_call.1} parent=11 // pred_check
          %p224 = pneg %p158
        $region26: #{tpu_custom_call.1} parent=11 // pred_check_branch
          %226 = sbr.rel (%p224) target = $region28
        $region27: #{tpu_custom_call.1} parent=11 // pred_region
          _
        $region28: #{tpu_custom_call.1} parent=11 // pred_fallthru
          _
      $region12: #{tpu_custom_call.1} parent=5 // pred_fallthru
        _
      %p227 = scmp.lt.s32.totalorder %s22, 2
      // Predicated region
      $region29: #{tpu_custom_call.1} parent=5 // pred_check
        %p228 = pneg %p227
      $region30: #{tpu_custom_call.1} parent=5 // pred_check_branch
        %230 = sbr.rel (%p228) target = $region32
      $region31: #{tpu_custom_call.1} parent=5 // pred_region
        // Predicated region
        $region33: #{tpu_custom_call.1} parent=31 // pred_check
          %p231 = pneg %p42
        $region34: #{tpu_custom_call.1} parent=31 // pred_check_branch
          %233 = sbr.rel (%p231) target = $region36
        $region35: #{tpu_custom_call.1} parent=31 // pred_region
          %s234 = sand.u32 %s32, 1
          %s235 = scalar_lea.sflag [#allocation5], %s234
          %s236 = sand.u32 %s32, 1
          %s237 = smul.addr %s236, 64
          %s238 = scalar_lea.vmem [#allocation4], %s237
          %s240 = ssub.s32 1024, 1024
          %241 = vsyncadd %s235, %s240
          %s242 = smul.addr %s22, 128
          %s243 = scalar_lea.hbm %s0, %s242
          %s244 = sshll.u32 %s238, 4
          %s245 = int_to_ptr.vmem [resolvable:$true] %s244
          %250 = dma.hbm_to_vmem [thread:$0]  %s243, 1024, %s245, %s235, 256, 128, 8
        $region36: #{tpu_custom_call.1} parent=31 // pred_fallthru
          _
        // Predicated region
        $region37: #{tpu_custom_call.1} parent=31 // pred_check
          %p251 = pneg %p68
        $region38: #{tpu_custom_call.1} parent=31 // pred_check_branch
          %253 = sbr.rel (%p251) target = $region40
        $region39: #{tpu_custom_call.1} parent=31 // pred_region
          %s254 = sand.u32 %s58, 1
          %s255 = scalar_lea.sflag [#allocation8], %s254
          %s256 = sand.u32 %s58, 1
          %s257 = smul.addr %s256, 64
          %s258 = scalar_lea.vmem [#allocation7], %s257
          %s260 = ssub.s32 1024, 1024
          %261 = vsyncadd %s255, %s260
          %s262 = smul.addr %s22, 128
          %s263 = scalar_lea.hbm %s1, %s262
          %s264 = sshll.u32 %s258, 4
          %s265 = int_to_ptr.vmem [resolvable:$true] %s264
          %270 = dma.hbm_to_vmem [thread:$0]  %s263, 1024, %s265, %s255, 256, 128, 8
        $region40: #{tpu_custom_call.1} parent=31 // pred_fallthru
          _
      $region32: #{tpu_custom_call.1} parent=5 // pred_fallthru
        _
      %p271 = scmp.le.s32.totalorder 1, %s22
      %p272 = scmp.lt.s32.totalorder %s22, 3
      %p273 = pnand %p271, %p272
      %p274 = pneg %p273
      // Predicated region
      $region41: #{tpu_custom_call.1} parent=5 // pred_check
        _
      $region42: #{tpu_custom_call.1} parent=5 // pred_check_branch
        %276 = sbr.rel (%p273) target = $region44
      $region43: #{tpu_custom_call.1} parent=5 // pred_region
        %s277 = ssub.s32 %s22, 1
        %s278 = sand.u32 %s35, 1
        %s279 = scalar_lea.sflag [#allocation5], %s278
        %s280 = sand.u32 %s35, 1
        %s281 = smul.addr %s280, 64
        %s282 = scalar_lea.vmem [#allocation4], %s281
        // Predicated region
        $region45: #{tpu_custom_call.1} parent=43 // pred_check
          %p283 = pneg %p48
        $region46: #{tpu_custom_call.1} parent=43 // pred_check_branch
          %285 = sbr.rel (%p283) target = $region48
        $region47: #{tpu_custom_call.1} parent=43 // pred_region
          %286 = dma.done %s279, 1024
        $region48: #{tpu_custom_call.1} parent=43 // pred_fallthru
          _
        %s287 = sand.u32 %s61, 1
        %s288 = scalar_lea.sflag [#allocation8], %s287
        %s289 = sand.u32 %s61, 1
        %s290 = smul.addr %s289, 64
        %s291 = scalar_lea.vmem [#allocation7], %s290
        // Predicated region
        $region49: #{tpu_custom_call.1} parent=43 // pred_check
          %p292 = pneg %p74
        $region50: #{tpu_custom_call.1} parent=43 // pred_check_branch
          %294 = sbr.rel (%p292) target = $region52
        $region51: #{tpu_custom_call.1} parent=43 // pred_region
          %295 = dma.done %s288, 1024
        $region52: #{tpu_custom_call.1} parent=43 // pred_fallthru
          _
        %s296 = sand.u32 %s35, 1
        %s297 = scalar_lea.sflag [#allocation5], %s296
        %s298 = sand.u32 %s35, 1
        %s299 = smul.addr %s298, 64
        %s300 = scalar_lea.vmem [#allocation4], %s299
        %p301 = pneg %p48
        %p302 = pneg %p45
        %s303 = sand.u32 %s61, 1
        %s304 = scalar_lea.sflag [#allocation8], %s303
        %s305 = sand.u32 %s61, 1
        %s306 = smul.addr %s305, 64
        %s307 = scalar_lea.vmem [#allocation7], %s306
        %p308 = pneg %p74
        %p309 = pneg %p71
        %p310 = pneg %p95
        %p311 = pneg %p92
        %p312 = pneg %p116
        %p313 = pneg %p113
        %p314 = pneg %p137
        %p315 = pneg %p134
        %p316 = pneg %p158
        %p317 = pneg %p155
        %p318 = pneg %p179
        %p319 = pneg %p176
        %p320 = pneg %p200
        %p321 = pneg %p197
        %p322 = scmp.eq.s32.totalorder %s27, 0
        // Predicated region
        $region53: #{tpu_custom_call.1} parent=43 // pred_check
          %p323 = pneg %p322
        $region54: #{tpu_custom_call.1} parent=43 // pred_check_branch
          %325 = sbr.rel (%p323) target = $region56
        $region55: #{tpu_custom_call.1} parent=43 // pred_region
          %vm326 = vcmask 254976
          %327 = vst.msk [vmem:[#allocation2] sm:$0x3] %vm326, 0.0
          %328 = vst.msk [vmem:[#allocation3] sm:$0x3] %vm326, 0.0
        $region56: #{tpu_custom_call.1} parent=43 // pred_fallthru
          _
        %v329 = vld [vmem:[#allocation2] sm:$0x3]
        %v330 = vld [vmem:[%s282] sm:$0xff]
        %v331 = vld [vmem:[%s282 + $0x8] sm:$0xff]
        %v332 = vld [vmem:[%s282 + $0x10] sm:$0xff]
        %v333 = vld [vmem:[%s282 + $0x18] sm:$0xff]
        %v334 = vld [vmem:[%s282 + $0x20] sm:$0xff]
        %v335 = vld [vmem:[%s282 + $0x28] sm:$0xff]
        %v336 = vld [vmem:[%s282 + $0x30] sm:$0xff]
        %v337 = vld [vmem:[%s282 + $0x38] sm:$0xff]
        %338 = vadd.xlane.f32.xlu0 %v330
        %v339 = vpop.xlane.xlu0 %338
        %340 = vadd.xlane.f32.xlu0 %v331
        %v341 = vpop.xlane.xlu0 %340
        %342 = vadd.xlane.f32.xlu0 %v332
        %v343 = vpop.xlane.xlu0 %342
        %344 = vadd.xlane.f32.xlu0 %v333
        %v345 = vpop.xlane.xlu0 %344
        %346 = vadd.xlane.f32.xlu0 %v334
        %v347 = vpop.xlane.xlu0 %346
        %348 = vadd.xlane.f32.xlu0 %v335
        %v349 = vpop.xlane.xlu0 %348
        %350 = vadd.xlane.f32.xlu0 %v336
        %v351 = vpop.xlane.xlu0 %350
        %352 = vadd.xlane.f32.xlu0 %v337
        %v353 = vpop.xlane.xlu0 %352
        %v362 = vlaneseq
        %v363 = vand.u32 %v362, 127
        %v364 = vlaneseq
        %v365 = vshrl.u32 %v364, 7
        %v366 = vsub.s32 %v363, %v365
        %v367 = vrot.slane %v339, %v366
        %v368 = vadd.s32 %v363, 4294967288
        %v369 = vlaneseq
        %v370 = vshrl.u32 %v369, 7
        %v371 = vsub.s32 %v368, %v370
        %v372 = vrot.slane %v341, %v371
        %vm373 = vcmask 130112
        %v374 = vsel %vm373, %v372, %v367
        %v375 = vadd.s32 %v363, 4294967280
        %v376 = vlaneseq
        %v377 = vshrl.u32 %v376, 7
        %v378 = vsub.s32 %v375, %v377
        %v379 = vrot.slane %v343, %v378
        %vm380 = vcmask 195712
        %v381 = vsel %vm380, %v379, %v374
        %v382 = vadd.s32 %v363, 4294967272
        %v383 = vlaneseq
        %v384 = vshrl.u32 %v383, 7
        %v385 = vsub.s32 %v382, %v384
        %v386 = vrot.slane %v345, %v385
        %vm387 = vcmask 261312
        %v388 = vsel %vm387, %v386, %v381
        %v389 = vlaneseq
        %v390 = vshrl.u32 %v389, 7
        %v391 = vsub.s32 %v363, %v390
        %v392 = vrot.slane %v347, %v391
        %v393 = vlaneseq
        %v394 = vshrl.u32 %v393, 7
        %v395 = vsub.s32 %v368, %v394
        %v396 = vrot.slane %v349, %v395
        %v397 = vsel %vm373, %v396, %v392
        %v398 = vlaneseq
        %v399 = vshrl.u32 %v398, 7
        %v400 = vsub.s32 %v375, %v399
        %v401 = vrot.slane %v351, %v400
        %v402 = vsel %vm380, %v401, %v397
        %v403 = vlaneseq
        %v404 = vshrl.u32 %v403, 7
        %v405 = vsub.s32 %v382, %v404
        %v406 = vrot.slane %v353, %v405
        %v407 = vsel %vm387, %v406, %v402
        %vm408 = vcmask 1041409
        %v409 = vsel %vm408, %v407, %v388
        %v411 = vadd.f32 %v329, %v409
        %vm412 = vcmask 254976
        %413 = vst.msk [vmem:[#allocation2] sm:$0x3] %vm412, %v411
        %v414 = vld [vmem:[#allocation3] sm:$0x3]
        %v415 = vld [vmem:[%s291] sm:$0xff]
        %v416 = vld [vmem:[%s291 + $0x8] sm:$0xff]
        %v417 = vld [vmem:[%s291 + $0x10] sm:$0xff]
        %v418 = vld [vmem:[%s291 + $0x18] sm:$0xff]
        %v419 = vld [vmem:[%s291 + $0x20] sm:$0xff]
        %v420 = vld [vmem:[%s291 + $0x28] sm:$0xff]
        %v421 = vld [vmem:[%s291 + $0x30] sm:$0xff]
        %v422 = vld [vmem:[%s291 + $0x38] sm:$0xff]
        %423 = vadd.xlane.f32.xlu0 %v415
        %v424 = vpop.xlane.xlu0 %423
        %425 = vadd.xlane.f32.xlu0 %v416
        %v426 = vpop.xlane.xlu0 %425
        %427 = vadd.xlane.f32.xlu0 %v417
        %v428 = vpop.xlane.xlu0 %427
        %429 = vadd.xlane.f32.xlu0 %v418
        %v430 = vpop.xlane.xlu0 %429
        %431 = vadd.xlane.f32.xlu0 %v419
        %v432 = vpop.xlane.xlu0 %431
        %433 = vadd.xlane.f32.xlu0 %v420
        %v434 = vpop.xlane.xlu0 %433
        %435 = vadd.xlane.f32.xlu0 %v421
        %v436 = vpop.xlane.xlu0 %435
        %437 = vadd.xlane.f32.xlu0 %v422
        %v438 = vpop.xlane.xlu0 %437
        %v447 = vlaneseq
        %v448 = vshrl.u32 %v447, 7
        %v449 = vsub.s32 %v363, %v448
        %v450 = vrot.slane %v424, %v449
        %v451 = vlaneseq
        %v452 = vshrl.u32 %v451, 7
        %v453 = vsub.s32 %v368, %v452
        %v454 = vrot.slane %v426, %v453
        %v455 = vsel %vm373, %v454, %v450
        %v456 = vlaneseq
        %v457 = vshrl.u32 %v456, 7
        %v458 = vsub.s32 %v375, %v457
        %v459 = vrot.slane %v428, %v458
        %v460 = vsel %vm380, %v459, %v455
        %v461 = vlaneseq
        %v462 = vshrl.u32 %v461, 7
        %v463 = vsub.s32 %v382, %v462
        %v464 = vrot.slane %v430, %v463
        %v465 = vsel %vm387, %v464, %v460
        %v466 = vlaneseq
        %v467 = vshrl.u32 %v466, 7
        %v468 = vsub.s32 %v363, %v467
        %v469 = vrot.slane %v432, %v468
        %v470 = vlaneseq
        %v471 = vshrl.u32 %v470, 7
        %v472 = vsub.s32 %v368, %v471
        %v473 = vrot.slane %v434, %v472
        %v474 = vsel %vm373, %v473, %v469
        %v475 = vlaneseq
        %v476 = vshrl.u32 %v475, 7
        %v477 = vsub.s32 %v375, %v476
        %v478 = vrot.slane %v436, %v477
        %v479 = vsel %vm380, %v478, %v474
        %v480 = vlaneseq
        %v481 = vshrl.u32 %v480, 7
        %v482 = vsub.s32 %v382, %v481
        %v483 = vrot.slane %v438, %v482
        %v484 = vsel %vm387, %v483, %v479
        %v485 = vsel %vm408, %v484, %v465
        %v487 = vadd.f32 %v414, %v485
        %488 = vst.msk [vmem:[#allocation3] sm:$0x3] %vm412, %v487
        %p489 = scmp.eq.s32.totalorder %s27, 1
        // Predicated region
        $region57: #{tpu_custom_call.1} parent=43 // pred_check
          %p490 = pneg %p489
        $region58: #{tpu_custom_call.1} parent=43 // pred_check_branch
          %492 = sbr.rel (%p490) target = $region60
        $region59: #{tpu_custom_call.1} parent=43 // pred_region
          %v493 = vld [vmem:[#allocation2] sm:$0x3]
          %v494 = vld [vmem:[#allocation3] sm:$0x3]
          %496 = vrot.lane.b32.xlu0 %v494, 32
          %v497 = vpop.permute.xlu0 %496
          %vm499 = vcmask 261120
          %v500 = vsel %vm499, %v493, %v497
          %v501 = vmul.f32 %v500, 0.00390625
          %v502 = vld [vmem:[%s2] sm:$0xff]
          %v503 = vld [vmem:[%s2 + $0x8] sm:$0xff]
          %v504 = vld [vmem:[%s2 + $0x10] sm:$0xff]
          %v505 = vld [vmem:[%s2 + $0x18] sm:$0xff]
          %v506 = vld [vmem:[%s2 + $0x20] sm:$0xff]
          %v507 = vld [vmem:[%s2 + $0x28] sm:$0xff]
          %v508 = vld [vmem:[%s2 + $0x30] sm:$0xff]
          %v509 = vld [vmem:[%s2 + $0x38] sm:$0xff]
          %v510 = vld [vmem:[%s3] sm:$0x1]
          %v512 = vlaneseq
          %v513 = vshrl.u32 %v512, 7
          %v514 = vsub.s32 0, %v513
          %v515 = vrot.slane %v510, %v514
          %vm517 = vcmask 523264
          %v519 = vsel %vm517, %v501, 0
          %521 = vmatprep.subr.mxu0 0.0
          %522 = vmatpush1.msra.mxu0 %v502
          %523 = vmatprep.subr.mxu0 0.0
          %524 = vmatpush1.msra.mxu0 %v503
          %525 = vmatprep.subr.mxu0 0.0
          %526 = vmatpush1.msra.mxu0 %v504
          %527 = vmatprep.subr.mxu0 0.0
          %528 = vmatpush1.msra.mxu0 %v505
          %529 = vmatprep.subr.mxu0 0.0
          %530 = vmatpush1.msra.mxu0 %v506
          %531 = vmatprep.subr.mxu0 0.0
          %532 = vmatpush1.msra.mxu0 %v507
          %533 = vmatprep.subr.mxu0 0.0
          %534 = vmatpush1.msra.mxu0 %v508
          %535 = vmatprep.subr.mxu0 0.0
          %536 = vmatpush1.msra.mxu0 %v509
          %537 = vmatprep.subr.mxu0 0.0
          %538 = vmatpush1.msra.mxu0 0.0
          %539 = vmatprep.subr.mxu0 0.0
          %540 = vmatpush1.msra.mxu0 0.0
          %541 = vmatprep.subr.mxu0 0.0
          %542 = vmatpush1.msra.mxu0 0.0
          %543 = vmatprep.subr.mxu0 0.0
          %544 = vmatpush1.msra.mxu0 0.0
          %545 = vmatprep.subr.mxu0 0.0
          %546 = vmatpush1.msra.mxu0 0.0
          %547 = vmatprep.subr.mxu0 0.0
          %548 = vmatpush1.msra.mxu0 0.0
          %549 = vmatprep.subr.mxu0 0.0
          %550 = vmatpush1.msra.mxu0 0.0
          %551 = vmatprep.subr.mxu0 0.0
          %552 = vmatpush1.msra.mxu0 0.0
          %553 = vmatprep.subr.mxu0 0.0
          %554 = vmatpush1.msra.mxu0 0.0
          %555 = vmatprep.subr.mxu0 0.0
          %556 = vmatpush1.msra.mxu0 0.0
          %557 = vmatprep.subr.mxu0 0.0
          %558 = vmatpush1.msra.mxu0 0.0
          %559 = vmatprep.subr.mxu0 0.0
          %560 = vmatpush1.msra.mxu0 0.0
          %561 = vmatprep.subr.mxu0 0.0
          %562 = vmatpush1.msra.mxu0 0.0
          %563 = vmatprep.subr.mxu0 0.0
          %564 = vmatpush1.msra.mxu0 0.0
          %565 = vmatprep.subr.mxu0 0.0
          %566 = vmatpush1.msra.mxu0 0.0
          %567 = vmatprep.subr.mxu0 0.0
          %568 = vmatpush1.msra.mxu0 0.0
          %569 = vmatprep.subr.mxu0 0.0
          %570 = vmatpush1.msra.mxu0 0.0
          %571 = vmatprep.subr.mxu0 0.0
          %572 = vmatpush1.msra.mxu0 0.0
          %573 = vmatprep.subr.mxu0 0.0
          %574 = vmatpush1.msra.mxu0 0.0
          %575 = vmatprep.subr.mxu0 0.0
          %576 = vmatpush1.msra.mxu0 0.0
          %577 = vmatprep.subr.mxu0 0.0
          %578 = vmatpush1.msra.mxu0 0.0
          %579 = vmatprep.subr.mxu0 0.0
          %580 = vmatpush1.msra.mxu0 0.0
          %581 = vmatprep.subr.mxu0 0.0
          %582 = vmatpush1.msra.mxu0 0.0
          %583 = vmatprep.subr.mxu0 0.0
          %584 = vmatpush1.msra.mxu0 0.0
          %585 = vmatprep.mubr.f32.mxu0 0.0
          %586 = vmatmul.mubr.f32.gmra.mrb[0].mxu0 %v519
          %v587 = vpop.f32.mrb[0].mxu0
          %v588 = vadd.f32 %v515, %v587
          %v589 = vpop.f32.mrb[0].mxu0
          %590 = vdwg.mxu0
          %v591 = vmax.f32 %v588, 0.0
          %v592 = vld [vmem:[%s4] sm:$0xff]
          %v593 = vld [vmem:[%s4 + $0x8] sm:$0xff]
          %v594 = vld [vmem:[%s5] sm:$0x1]
          %v596 = vlaneseq
          %v597 = vshrl.u32 %v596, 7
          %v598 = vsub.s32 0, %v597
          %v599 = vrot.slane %v594, %v598
          %vm601 = vcmask 130048
          %v603 = vsel %vm601, %v591, 0
          %605 = vmatprep.subr.mxu0 0.0
          %606 = vmatpush1.msra.mxu0 %v592
          %607 = vmatprep.subr.mxu0 0.0
          %608 = vmatpush1.msra.mxu0 %v593
          %609 = vmatprep.subr.mxu0 0.0
          %610 = vmatpush1.msra.mxu0 0.0
          %611 = vmatprep.subr.mxu0 0.0
          %612 = vmatpush1.msra.mxu0 0.0
          %613 = vmatprep.subr.mxu0 0.0
          %614 = vmatpush1.msra.mxu0 0.0
          %615 = vmatprep.subr.mxu0 0.0
          %616 = vmatpush1.msra.mxu0 0.0
          %617 = vmatprep.subr.mxu0 0.0
          %618 = vmatpush1.msra.mxu0 0.0
          %619 = vmatprep.subr.mxu0 0.0
          %620 = vmatpush1.msra.mxu0 0.0
          %621 = vmatprep.subr.mxu0 0.0
          %622 = vmatpush1.msra.mxu0 0.0
          %623 = vmatprep.subr.mxu0 0.0
          %624 = vmatpush1.msra.mxu0 0.0
          %625 = vmatprep.subr.mxu0 0.0
          %626 = vmatpush1.msra.mxu0 0.0
          %627 = vmatprep.subr.mxu0 0.0
          %628 = vmatpush1.msra.mxu0 0.0
          %629 = vmatprep.subr.mxu0 0.0
          %630 = vmatpush1.msra.mxu0 0.0
          %631 = vmatprep.subr.mxu0 0.0
          %632 = vmatpush1.msra.mxu0 0.0
          %633 = vmatprep.subr.mxu0 0.0
          %634 = vmatpush1.msra.mxu0 0.0
          %635 = vmatprep.subr.mxu0 0.0
          %636 = vmatpush1.msra.mxu0 0.0
          %637 = vmatprep.subr.mxu0 0.0
          %638 = vmatpush1.msra.mxu0 0.0
          %639 = vmatprep.subr.mxu0 0.0
          %640 = vmatpush1.msra.mxu0 0.0
          %641 = vmatprep.subr.mxu0 0.0
          %642 = vmatpush1.msra.mxu0 0.0
          %643 = vmatprep.subr.mxu0 0.0
          %644 = vmatpush1.msra.mxu0 0.0
          %645 = vmatprep.subr.mxu0 0.0
          %646 = vmatpush1.msra.mxu0 0.0
          %647 = vmatprep.subr.mxu0 0.0
          %648 = vmatpush1.msra.mxu0 0.0
          %649 = vmatprep.subr.mxu0 0.0
          %650 = vmatpush1.msra.mxu0 0.0
          %651 = vmatprep.subr.mxu0 0.0
          %652 = vmatpush1.msra.mxu0 0.0
          %653 = vmatprep.subr.mxu0 0.0
          %654 = vmatpush1.msra.mxu0 0.0
          %655 = vmatprep.subr.mxu0 0.0
          %656 = vmatpush1.msra.mxu0 0.0
          %657 = vmatprep.subr.mxu0 0.0
          %658 = vmatpush1.msra.mxu0 0.0
          %659 = vmatprep.subr.mxu0 0.0
          %660 = vmatpush1.msra.mxu0 0.0
          %661 = vmatprep.subr.mxu0 0.0
          %662 = vmatpush1.msra.mxu0 0.0
          %663 = vmatprep.subr.mxu0 0.0
          %664 = vmatpush1.msra.mxu0 0.0
          %665 = vmatprep.subr.mxu0 0.0
          %666 = vmatpush1.msra.mxu0 0.0
          %667 = vmatprep.subr.mxu0 0.0
          %668 = vmatpush1.msra.mxu0 0.0
          %669 = vmatprep.mubr.f32.mxu0 0.0
          %670 = vmatmul.mubr.f32.gmra.mrb[0].mxu0 %v603
          %v671 = vpop.f32.mrb[0].mxu0
          %v672 = vadd.f32 %v599, %v671
          %v673 = vpop.f32.mrb[0].mxu0
          %674 = vdwg.mxu0
          %v675 = vxor.u32 %v672, 2147483648
          %v676 = vmul.f32 %v675, 1.442695
          %v677 = vpow.pop %v676
          %v678 = vadd.f32 %v677, 1.0
          %v679 = vrcp.pop %v678
          %v680 = vmul.f32 1.0, %v679
          %v681 = vsel %vm412, %v493, 0.0
          %682 = vadd.xlane.f32.xlu0 %v681
          %v683 = vpop.xlane.xlu0 %682
          %v684 = vrot.slane %v683, 4
          %v685 = vadd.f32 %v683, %v684
          %v686 = vrot.slane %v685, 2
          %v687 = vadd.f32 %v685, %v686
          %v688 = vrot.slane %v687, 1
          %v689 = vadd.f32 %v687, %v688
          %s690 = vtos %v689
          %v691 = vstv %s690
          %v692 = vsel %vm412, %v494, 0.0
          %693 = vadd.xlane.f32.xlu0 %v692
          %v694 = vpop.xlane.xlu0 %693
          %v695 = vrot.slane %v694, 4
          %v696 = vadd.f32 %v694, %v695
          %v697 = vrot.slane %v696, 2
          %v698 = vadd.f32 %v696, %v697
          %v699 = vrot.slane %v698, 1
          %v700 = vadd.f32 %v698, %v699
          %s701 = vtos %v700
          %v702 = vstv %s701
          %vm703 = vcmp.lt.f32.partialorder %v691, 1e-06
          %v704 = vsel %vm703, 1, 0
          %vm705 = vcmp.eq.s32.totalorder %v704, 1
          %v706 = vsel %vm705, 1.0, %v680
          %707 = vst.msk [vmem:[#allocation9] sm:$0x3] %vm412, %v706
          %vm708 = vcmp.lt.f32.partialorder %v702, 1e-06
          %v709 = vsel %vm708, 1, 0
          %vm710 = vcmp.eq.s32.totalorder %v709, 1
          %v711 = vsel %vm710, 1.0, %v680
          %713 = vrot.lane.b32.xlu0 %v711, 96
          %v714 = vpop.permute.xlu0 %713
          %716 = vst.msk [vmem:[#allocation10] sm:$0x3] %vm412, %v714
        $region60: #{tpu_custom_call.1} parent=43 // pred_fallthru
          _
        // Predicated region
        $region61: #{tpu_custom_call.1} parent=43 // pred_check
          %p717 = pneg %p176
        $region62: #{tpu_custom_call.1} parent=43 // pred_check_branch
          %719 = sbr.rel (%p717) target = $region64
        $region63: #{tpu_custom_call.1} parent=43 // pred_region
          %s721 = ssub.s32 32, 32
          %722 = vsyncadd [#allocation6], %s721
          %s724 = sshll.u32 [#allocation9], 4
          %s725 = int_to_ptr.vmem [resolvable:$true] %s724
          %727 = dma.vmem_to_hbm [thread:$0]  %s725, 32, %s6, [#allocation6]
        $region64: #{tpu_custom_call.1} parent=43 // pred_fallthru
          _
        // Predicated region
        $region65: #{tpu_custom_call.1} parent=43 // pred_check
          %p728 = pneg %p197
        $region66: #{tpu_custom_call.1} parent=43 // pred_check_branch
          %730 = sbr.rel (%p728) target = $region68
        $region67: #{tpu_custom_call.1} parent=43 // pred_region
          %s732 = ssub.s32 32, 32
          %733 = vsyncadd [#allocation11], %s732
          %s735 = sshll.u32 [#allocation10], 4
          %s736 = int_to_ptr.vmem [resolvable:$true] %s735
          %738 = dma.vmem_to_hbm [thread:$0]  %s736, 32, %s7, [#allocation11]
        $region68: #{tpu_custom_call.1} parent=43 // pred_fallthru
          _
        // Predicated region
        $region69: #{tpu_custom_call.1} parent=43 // pred_check
          %p739 = pneg %p176
        $region70: #{tpu_custom_call.1} parent=43 // pred_check_branch
          %741 = sbr.rel (%p739) target = $region72
        $region71: #{tpu_custom_call.1} parent=43 // pred_region
          %742 = dma.done [#allocation6], 32
        $region72: #{tpu_custom_call.1} parent=43 // pred_fallthru
          _
        // Predicated region
        $region73: #{tpu_custom_call.1} parent=43 // pred_check
          %p743 = pneg %p197
        $region74: #{tpu_custom_call.1} parent=43 // pred_check_branch
          %745 = sbr.rel (%p743) target = $region76
        $region75: #{tpu_custom_call.1} parent=43 // pred_region
          %746 = dma.done [#allocation11], 32
        $region76: #{tpu_custom_call.1} parent=43 // pred_fallthru
          _
      $region44: #{tpu_custom_call.1} parent=5 // pred_fallthru
        _
      %p747 = scmp.le.s32.totalorder 2, %s22
      // Predicated region
      $region77: #{tpu_custom_call.1} parent=5 // pred_check
        %p748 = pneg %p747
      $region78: #{tpu_custom_call.1} parent=5 // pred_check_branch
        %750 = sbr.rel (%p748) target = $region80
      $region79: #{tpu_custom_call.1} parent=5 // pred_region
        %s751 = ssub.s32 %s22, 2
      $region80: #{tpu_custom_call.1} parent=5 // pred_fallthru
        _
    $region6: #{tpu_custom_call.1} parent=1 // loop_footer
      %s26 = sadd.s32 1, %s22
    $region7: #{tpu_custom_call.1} parent=1 // loop_footer_branch
      %21 = sbr.rel target = $region3
    $region8: #{tpu_custom_call.1} parent=1 // loop_exit
      _
    %752 = vsyncpa [#allocation5], 1
    %s753 = scalar_lea.sflag [#allocation5], 1
    %754 = vsyncpa %s753, 1
    %755 = vsyncpa [#allocation8], 1
    %s756 = scalar_lea.sflag [#allocation8], 1
    %757 = vsyncpa %s756, 1
    %758 = vsyncpa [#allocation6], 1
    %s759 = scalar_lea.sflag [#allocation6], 1
    %760 = vsyncpa %s759, 1
    %761 = vsyncpa [#allocation11], 1

</llo_original>
